<compile_context>
chip_gen: v5e
topology: v5e:2x2
jax: 0.10.0
libtpu: 0.0.40
codegen_flags: <defaults>
</compile_context>

<pallas_src>
import functools

import jax
import jax.numpy as jnp
import numpy as np
from jax.experimental import pallas as pl
from jax.experimental.pallas import tpu as pltpu

LN_EPS = 1e-5
LORA_SCALE = 1.0


def _round_up(x, m):
    return (x + m - 1) // m * m


def _pad2(a, rows, cols):
    return jnp.pad(a, ((0, rows - a.shape[0]), (0, cols - a.shape[1])))


def _choose_tile(n, tile_rows):
    """Row-tile size: avoid over-padding small N, keep >=2 grid steps when the
    work is large enough (v7x megacore sharding via dimension_semantics)."""
    n16 = _round_up(max(n, 1), 16)          # 16-row sublane granule for bf16 x
    tile = min(tile_rows, n16)
    if _round_up(n16, tile) // tile < 2 and n16 >= 256:
        tile = _round_up((n16 + 1) // 2, 16)
    return tile


def _make_city_adapt_kernel(h_valid, h_pad):
    """Build the fused kernel; h_valid / h_pad are trace-time constants."""
    inv_h = 1.0 / float(h_valid)
    pad_cols = float(h_pad - h_valid)

    def kernel(x_ref, w1_ref, vec_ref, wf_ref, lb_ref, out_ref):
        # vec rows: 0 = b1, 1 = ln_gamma, 2 = ln_beta, 3 = bg   (all padded with 0)
        b1 = vec_ref[0:1, :]
        ln_g = vec_ref[1:2, :]
        ln_b = vec_ref[2:3, :]
        bg = vec_ref[3:4, :]

        # shared_knowledge_extractor: Linear -> LayerNorm -> ReLU
        h = jnp.dot(x_ref[...], w1_ref[...],
                    preferred_element_type=jnp.float32) + b1
        # Padded hidden columns of h are exactly zero -> padded sums divided by
        # the *true* hidden_dim give the exact mean.  The variance uses the
        # stable (h - mean)^2 form; padded columns each contribute mean^2, which
        # is subtracted exactly via pad_cols * mean^2.
        mean = jnp.sum(h, axis=-1, keepdims=True) * inv_h
        diff = h - mean
        var = (jnp.sum(diff * diff, axis=-1, keepdims=True)
               - pad_cols * mean * mean) * inv_h
        h_norm = diff * jax.lax.rsqrt(var + LN_EPS) * ln_g + ln_b
        shared = jnp.maximum(h_norm, 0.0)           # padded cols stay exactly 0
        shared_bf = shared.astype(jnp.bfloat16)

        # One fused MXU pass: [gate_logits_wo_bias | low] = shared @ [Wg_total | A]
        # where Wg_total = Wg_s + Wg_c + A @ (scale * B @ Wg_c)   (precomputed).
        fused = jnp.dot(shared_bf, wf_ref[...], preferred_element_type=jnp.float32)
        gate = jax.nn.sigmoid(fused[:, :h_pad] + bg)          # fusion_gate
        low = fused[:, h_pad:].astype(jnp.bfloat16)           # LoRA down-proj

        # LoRA up-projection (LORA_SCALE folded into B in the wrapper).
        delta = jnp.dot(low, lb_ref[...], preferred_element_type=jnp.float32)

        # gate*shared + (1-gate)*specific  with  specific = shared + delta
        out_ref[...] = (shared + (1.0 - gate) * delta).astype(out_ref.dtype)

    return kernel


@functools.partial(jax.jit, static_argnames=("tile_rows", "out_dtype"))
def city_adaptation_forward(x, params, *, tile_rows=256, out_dtype=jnp.float32):
    """x: (..., input_dim) float32.  Returns (..., hidden_dim) in out_dtype."""
    lead = x.shape[:-1]
    din = x.shape[-1]
    x2 = x.reshape(-1, din)
    n = x2.shape[0]

    hid = params["w1"].shape[1]
    rank = params["lora_a"].shape[1]

    din_p = _round_up(din, 128)
    h_p = _round_up(hid, 128)
    r_p = _round_up(rank, 128)            # lane-align the [Wg_total | A] split
    tile = _choose_tile(n, tile_rows)
    n_p = _round_up(max(n, 1), tile)

    # --- pad + precompute (matmul operands bf16, vector constants f32) -------
    x_p = _pad2(x2, n_p, din_p).astype(jnp.bfloat16)
    w1 = _pad2(params["w1"], din_p, h_p).astype(jnp.bfloat16)

    lora_b_scaled = LORA_SCALE * params["lora_b"]              # fold scale (f32)
    bwc = lora_b_scaled @ params["wg_spec"]                    # B @ Wg_c  (r, H)
    wg_total = (params["wg_shared"] + params["wg_spec"]
                + params["lora_a"] @ bwc)                      # full gate fold
    w_fused = jnp.concatenate(
        [_pad2(wg_total, h_p, h_p), _pad2(params["lora_a"], h_p, r_p)],
        axis=1).astype(jnp.bfloat16)                           # (H_p, H_p + R_p)
    lora_b = _pad2(lora_b_scaled, r_p, h_p).astype(jnp.bfloat16)

    # b1 / ln_gamma / ln_beta / bg stacked into one (4, H_p) f32 buffer.
    vecs = jnp.concatenate(
        [_pad2(params["b1"], 1, h_p), _pad2(params["ln_g"], 1, h_p),
         _pad2(params["ln_b"], 1, h_p), _pad2(params["bg"], 1, h_p)], axis=0)

    kernel = _make_city_adapt_kernel(h_valid=hid, h_pad=h_p)

    def full(a, bufs=1):
        nd = a.ndim
        shape = tuple(a.shape)
        idx = lambda *_: (0,) * nd
        try:  # single-buffer grid-invariant weights (halves their VMEM footprint)
            return pl.BlockSpec(shape, idx, pipeline_mode=pl.Buffered(bufs))
        except TypeError:
            return pl.BlockSpec(shape, idx)

    # --- VMEM budget derived from the actual buffers (per-chip capacity) -----
    def nbytes(a):
        return a.size * a.dtype.itemsize

    out_itemsize = np.dtype(out_dtype).itemsize
    weight_bytes = nbytes(w1) + nbytes(w_fused) + nbytes(lora_b) + 8 * h_p * 4
    io_bytes = 2 * tile * din_p * 2 + 2 * tile * h_p * out_itemsize   # dbl-buffered
    scratch_bytes = tile * (5 * h_p + r_p) * 4                        # f32 temps
    needed = weight_bytes + io_bytes + scratch_bytes
    try:
        phys = int(getattr(pltpu.get_tpu_info(), "vmem_capacity_bytes", 64 << 20))
    except Exception:  # pragma: no cover - non-TPU / older API fallback
        phys = 64 << 20
    vmem_limit = int(max(16 << 20, min(needed * 1.25 + (2 << 20), 0.85 * phys)))

    row_in = pl.BlockSpec((tile, din_p), lambda i: (i, 0))
    row_out = pl.BlockSpec((tile, h_p), lambda i: (i, 0))

    grid = (n_p // tile,)
    out_p = pl.pallas_call(
        kernel,
        out_shape=jax.ShapeDtypeStruct((n_p, h_p), out_dtype),
        grid_spec=pltpu.PrefetchScalarGridSpec(
            num_scalar_prefetch=0,
            grid=grid,
            in_specs=[
                row_in,          # x tile              (tile, Din_p)      bf16
                full(w1),        # (Din_p, H_p)                           bf16
                full(vecs),      # (4, H_p)  b1/gamma/beta/bg             f32
                full(w_fused),   # (H_p, H_p + R_p)  [Wg_total | A]       bf16
                full(lora_b),    # (R_p, H_p)  scale*B                    bf16
            ],
            out_specs=row_out,
        ),
        compiler_params=pltpu.CompilerParams(
            dimension_semantics=("parallel",),
            vmem_limit_bytes=vmem_limit),
    )(x_p, w1, vecs, w_fused, lora_b)

    return out_p[:n, :hid].reshape(*lead, hid)


def init_params(key, input_dim, hidden_dim, lora_rank):
    ks = jax.random.split(key, 6)
    return {
        "w1": jax.random.normal(ks[0], (input_dim, hidden_dim), jnp.float32) * 0.1,
        "b1": jax.random.normal(ks[1], (1, hidden_dim), jnp.float32) * 0.01,
        "ln_g": jnp.ones((1, hidden_dim), jnp.float32),
        "ln_b": jnp.zeros((1, hidden_dim), jnp.float32),
        "lora_a": jax.random.normal(ks[2], (hidden_dim, lora_rank), jnp.float32) * 0.1,
        "lora_b": jax.random.normal(ks[3], (lora_rank, hidden_dim), jnp.float32) * 0.1,
        "wg_shared": jax.random.normal(ks[4], (hidden_dim, hidden_dim), jnp.float32) * 0.1,
        "wg_spec": jax.random.normal(ks[5], (hidden_dim, hidden_dim), jnp.float32) * 0.1,
        "bg": jnp.zeros((1, hidden_dim), jnp.float32),
    }


def reference_forward(x, p):
    """Pure-JAX f32 reference matching the PyTorch forward."""
    h = x @ p["w1"] + p["b1"]
    mean = jnp.mean(h, axis=-1, keepdims=True)
    var = jnp.mean((h - mean) ** 2, axis=-1, keepdims=True)
    hn = (h - mean) / jnp.sqrt(var + LN_EPS) * p["ln_g"] + p["ln_b"]
    shared = jax.nn.relu(hn)
    specific = shared + LORA_SCALE * ((shared @ p["lora_a"]) @ p["lora_b"])
    gate = jax.nn.sigmoid(shared @ p["wg_shared"] + specific @ p["wg_spec"] + p["bg"])
    return gate * shared + (1.0 - gate) * specific


if __name__ == "__main__":
    key = jax.random.PRNGKey(0)
    k_x, k_p = jax.random.split(key)

    batch, seq, input_dim, hidden_dim, lora_rank = 2, 8, 32, 32, 4
    x = jax.random.normal(k_x, (batch, seq, input_dim), jnp.float32)
    params = init_params(k_p, input_dim, hidden_dim, lora_rank)

    out = city_adaptation_forward(x, params)            # tile_rows=256 default
    out = jax.block_until_ready(out)

    ref = reference_forward(x, params)
    assert out.shape == (batch, seq, hidden_dim)
    max_err = float(jnp.max(jnp.abs(out - ref)))
    # bf16 MXU operands + algebraic gate folding -> loosened tolerance vs f32 ref.
    assert jnp.allclose(out, ref, atol=5e-2, rtol=5e-2), \
        f"mismatch vs reference (max abs err {max_err:.4e})"

    print("KERNEL_OK")
</pallas_src>

<mosaic_0001>
module attributes {stable_mosaic.version = 11 : i64} {
  func.func @kernel(%arg0: i32, %arg1: memref<16x128xbf16, #tpu.memory_space<vmem>>, %arg2: memref<128x128xbf16, #tpu.memory_space<vmem>>, %arg3: memref<4x128xf32, #tpu.memory_space<vmem>>, %arg4: memref<128x256xbf16, #tpu.memory_space<vmem>>, %arg5: memref<128x128xbf16, #tpu.memory_space<vmem>>, %arg6: memref<16x128xf32, #tpu.memory_space<vmem>>) attributes {dimension_semantics = [#tpu.dimension_semantics<parallel>], iteration_bounds = array<i64: 1>, scalar_prefetch = 0 : i64, scratch_operands = 0 : i64, tpu.core_type = #tpu.core_type<tc>, window_params = [{transform_indices = @transform_0, window_bounds = array<i64: 16, 128>}, {pipeline_mode = #tpu.pipeline_mode<synchronous>, transform_indices = @transform_1, window_bounds = array<i64: 128, 128>}, {pipeline_mode = #tpu.pipeline_mode<synchronous>, transform_indices = @transform_2, window_bounds = array<i64: 4, 128>}, {pipeline_mode = #tpu.pipeline_mode<synchronous>, transform_indices = @transform_3, window_bounds = array<i64: 128, 256>}, {pipeline_mode = #tpu.pipeline_mode<synchronous>, transform_indices = @transform_4, window_bounds = array<i64: 128, 128>}, {transform_indices = @transform_5, window_bounds = array<i64: 16, 128>}]} {
    %c0 = arith.constant 0 : index
    %c0_0 = arith.constant 0 : index
    %0 = vector.load %arg3[%c0, %c0_0] : memref<4x128xf32, #tpu.memory_space<vmem>>, vector<1x128xf32>
    %c1 = arith.constant 1 : index
    %c0_1 = arith.constant 0 : index
    %1 = vector.load %arg3[%c1, %c0_1] : memref<4x128xf32, #tpu.memory_space<vmem>>, vector<1x128xf32>
    %c2 = arith.constant 2 : index
    %c0_2 = arith.constant 0 : index
    %2 = vector.load %arg3[%c2, %c0_2] : memref<4x128xf32, #tpu.memory_space<vmem>>, vector<1x128xf32>
    %c3 = arith.constant 3 : index
    %c0_3 = arith.constant 0 : index
    %3 = vector.load %arg3[%c3, %c0_3] : memref<4x128xf32, #tpu.memory_space<vmem>>, vector<1x128xf32>
    %c0_4 = arith.constant 0 : index
    %c0_5 = arith.constant 0 : index
    %4 = vector.load %arg1[%c0_4, %c0_5] : memref<16x128xbf16, #tpu.memory_space<vmem>>, vector<16x128xbf16>
    %c0_6 = arith.constant 0 : index
    %c0_7 = arith.constant 0 : index
    %5 = vector.load %arg2[%c0_6, %c0_7] : memref<128x128xbf16, #tpu.memory_space<vmem>>, vector<128x128xbf16>
    %cst = arith.constant dense<0.000000e+00> : vector<16x128xf32>
    %6 = tpu.matmul %4, %5, %cst {dimension_numbers = #tpu.dot_dimension_numbers<[1], [0], [0], [1], [0, 0, 1, 1], [], []>} : vector<16x128xbf16>, vector<128x128xbf16>, vector<16x128xf32> -> vector<16x128xf32>
    %7 = vector.broadcast %0 : vector<1x128xf32> to vector<16x128xf32>
    %8 = arith.addf %6, %7 : vector<16x128xf32>
    %cst_8 = arith.constant dense<0.000000e+00> : vector<16xf32>
    %9 = vector.multi_reduction <add>, %8, %cst_8 [1] : vector<16x128xf32> to vector<16xf32>
    %10 = vector.shape_cast %9 : vector<16xf32> to vector<16x1xf32>
    %cst_9 = arith.constant 3.125000e-02 : f32
    %11 = vector.broadcast %cst_9 : f32 to vector<16x1xf32>
    %12 = arith.mulf %10, %11 : vector<16x1xf32>
    %13 = vector.broadcast %12 : vector<16x1xf32> to vector<16x128xf32>
    %14 = arith.subf %8, %13 : vector<16x128xf32>
    %15 = arith.mulf %14, %14 : vector<16x128xf32>
    %cst_10 = arith.constant dense<0.000000e+00> : vector<16xf32>
    %16 = vector.multi_reduction <add>, %15, %cst_10 [1] : vector<16x128xf32> to vector<16xf32>
    %17 = vector.shape_cast %16 : vector<16xf32> to vector<16x1xf32>
    %cst_11 = arith.constant 9.600000e+01 : f32
    %18 = vector.broadcast %cst_11 : f32 to vector<16x1xf32>
    %19 = arith.mulf %18, %12 : vector<16x1xf32>
    %20 = arith.mulf %19, %12 : vector<16x1xf32>
    %21 = arith.subf %17, %20 : vector<16x1xf32>
    %cst_12 = arith.constant 3.125000e-02 : f32
    %22 = vector.broadcast %cst_12 : f32 to vector<16x1xf32>
    %23 = arith.mulf %21, %22 : vector<16x1xf32>
    %cst_13 = arith.constant 9.99999974E-6 : f32
    %24 = vector.broadcast %cst_13 : f32 to vector<16x1xf32>
    %25 = arith.addf %23, %24 : vector<16x1xf32>
    %26 = math.rsqrt %25 : vector<16x1xf32>
    %27 = vector.broadcast %26 : vector<16x1xf32> to vector<16x128xf32>
    %28 = arith.mulf %14, %27 : vector<16x128xf32>
    %29 = vector.broadcast %1 : vector<1x128xf32> to vector<16x128xf32>
    %30 = arith.mulf %28, %29 : vector<16x128xf32>
    %31 = vector.broadcast %2 : vector<1x128xf32> to vector<16x128xf32>
    %32 = arith.addf %30, %31 : vector<16x128xf32>
    %cst_14 = arith.constant 0.000000e+00 : f32
    %33 = vector.broadcast %cst_14 : f32 to vector<16x128xf32>
    %34 = arith.maximumf %32, %33 : vector<16x128xf32>
    %35 = arith.truncf %34 : vector<16x128xf32> to vector<16x128xbf16>
    %c0_15 = arith.constant 0 : index
    %c0_16 = arith.constant 0 : index
    %36 = vector.load %arg4[%c0_15, %c0_16] : memref<128x256xbf16, #tpu.memory_space<vmem>>, vector<128x256xbf16>
    %cst_17 = arith.constant dense<0.000000e+00> : vector<16x256xf32>
    %37 = tpu.matmul %35, %36, %cst_17 {dimension_numbers = #tpu.dot_dimension_numbers<[1], [0], [0], [1], [0, 0, 1, 1], [], []>} : vector<16x128xbf16>, vector<128x256xbf16>, vector<16x256xf32> -> vector<16x256xf32>
    %38 = vector.extract_strided_slice %37 {offsets = [0, 0], sizes = [16, 128], strides = [1, 1]} : vector<16x256xf32> to vector<16x128xf32>
    %39 = vector.broadcast %3 : vector<1x128xf32> to vector<16x128xf32>
    %40 = arith.addf %38, %39 : vector<16x128xf32>
    %41 = arith.negf %40 : vector<16x128xf32>
    %42 = math.exp %41 : vector<16x128xf32>
    %cst_18 = arith.constant 1.000000e+00 : f32
    %43 = vector.broadcast %cst_18 : f32 to vector<16x128xf32>
    %44 = arith.addf %43, %42 : vector<16x128xf32>
    %45 = arith.divf %43, %44 : vector<16x128xf32>
    %46 = vector.extract_strided_slice %37 {offsets = [0, 128], sizes = [16, 128], strides = [1, 1]} : vector<16x256xf32> to vector<16x128xf32>
    %47 = arith.truncf %46 : vector<16x128xf32> to vector<16x128xbf16>
    %c0_19 = arith.constant 0 : index
    %c0_20 = arith.constant 0 : index
    %48 = vector.load %arg5[%c0_19, %c0_20] : memref<128x128xbf16, #tpu.memory_space<vmem>>, vector<128x128xbf16>
    %cst_21 = arith.constant dense<0.000000e+00> : vector<16x128xf32>
    %49 = tpu.matmul %47, %48, %cst_21 {dimension_numbers = #tpu.dot_dimension_numbers<[1], [0], [0], [1], [0, 0, 1, 1], [], []>} : vector<16x128xbf16>, vector<128x128xbf16>, vector<16x128xf32> -> vector<16x128xf32>
    %cst_22 = arith.constant 1.000000e+00 : f32
    %50 = vector.broadcast %cst_22 : f32 to vector<16x128xf32>
    %51 = arith.subf %50, %45 : vector<16x128xf32>
    %52 = arith.mulf %51, %49 : vector<16x128xf32>
    %53 = arith.addf %34, %52 : vector<16x128xf32>
    %c0_23 = arith.constant 0 : index
    %c0_24 = arith.constant 0 : index
    %54 = vector.load %arg6[%c0_23, %c0_24] : memref<16x128xf32, #tpu.memory_space<vmem>>, vector<16x128xf32>
    tpu.vector_store %arg6[%c0_23, %c0_24], %53 {strides = array<i32>} : memref<16x128xf32, #tpu.memory_space<vmem>>, vector<16x128xf32>,
    return
  }
  func.func @transform_0(%arg0: i32) -> (i32, i32) {
    %c0_i32 = arith.constant 0 : i32
    %c0_i32_0 = arith.constant 0 : i32
    return %arg0, %c0_i32 : i32, i32
  }
  func.func @transform_1(%arg0: i32) -> (i32, i32) {
    %c0_i32 = arith.constant 0 : i32
    %c0_i32_0 = arith.constant 0 : i32
    %c0_i32_1 = arith.constant 0 : i32
    return %c0_i32, %c0_i32_0 : i32, i32
  }
  func.func @transform_2(%arg0: i32) -> (i32, i32) {
    %c0_i32 = arith.constant 0 : i32
    %c0_i32_0 = arith.constant 0 : i32
    %c0_i32_1 = arith.constant 0 : i32
    return %c0_i32, %c0_i32_0 : i32, i32
  }
  func.func @transform_3(%arg0: i32) -> (i32, i32) {
    %c0_i32 = arith.constant 0 : i32
    %c0_i32_0 = arith.constant 0 : i32
    %c0_i32_1 = arith.constant 0 : i32
    return %c0_i32, %c0_i32_0 : i32, i32
  }
  func.func @transform_4(%arg0: i32) -> (i32, i32) {
    %c0_i32 = arith.constant 0 : i32
    %c0_i32_0 = arith.constant 0 : i32
    %c0_i32_1 = arith.constant 0 : i32
    return %c0_i32, %c0_i32_0 : i32, i32
  }
  func.func @transform_5(%arg0: i32) -> (i32, i32) {
    %c0_i32 = arith.constant 0 : i32
    %c0_i32_0 = arith.constant 0 : i32
    return %arg0, %c0_i32 : i32, i32
  }
}

</mosaic_0001>

<llo_original>
// kernel: city_adaptation_forward.1
$region0: #{city_adaptation_forward.1}
  #allocation0 [shape = 'u32[]', space=smem, size = 0x4, offset = 0x4, fixed_abs, tag = 'smem constant byte address 0x4 - core index']
  #allocation1 [shape = 'u32[72,128]{1,0:T(1,128)}', space=vmem, size = 0x9000, scoped, tag = 'internal scratch']
  %s0 = inlined_call_operand.vmem [shape: bf16[16,128], index: 0, kind: input, shape index: {}]
  %s1 = inlined_call_operand.vmem [shape: bf16[128,128], index: 1, kind: input, shape index: {}]
  %s2 = inlined_call_operand.vmem [shape: f32[4,128], index: 2, kind: input, shape index: {}]
  %s3 = inlined_call_operand.vmem [shape: bf16[128,256], index: 3, kind: input, shape index: {}]
  %s4 = inlined_call_operand.vmem [shape: bf16[128,128], index: 4, kind: input, shape index: {}]
  %s5 = inlined_call_operand.vmem [shape: f32[16,128], index: 5, kind: output, shape index: {}]
  %s6 = sld [smem:[#allocation0]]
  $region30: #{city_adaptation_forward.1} parent=0
    _
  %s8 = ssub.s32 1, %s6
  %s9 = scalar_select 0, %s8, %s6
  // Predicated region
  $region2: #{city_adaptation_forward.1} parent=0 // pred_check
    _
  $region3: #{city_adaptation_forward.1} parent=0 // pred_check_branch
    %11 = sbr.rel (0) target = $region5
  $region4: #{city_adaptation_forward.1} parent=0 // pred_region
    _
  $region5: #{city_adaptation_forward.1} parent=0 // pred_fallthru
    _
  // Predicated region
  $region6: #{city_adaptation_forward.1} parent=0 // pred_check
    _
  $region7: #{city_adaptation_forward.1} parent=0 // pred_check_branch
    %13 = sbr.rel (0) target = $region9
  $region8: #{city_adaptation_forward.1} parent=0 // pred_region
    _
  $region9: #{city_adaptation_forward.1} parent=0 // pred_fallthru
    _
  // Predicated region
  $region10: #{city_adaptation_forward.1} parent=0 // pred_check
    _
  $region11: #{city_adaptation_forward.1} parent=0 // pred_check_branch
    %15 = sbr.rel (0) target = $region13
  $region12: #{city_adaptation_forward.1} parent=0 // pred_region
    _
  $region13: #{city_adaptation_forward.1} parent=0 // pred_fallthru
    _
  // Predicated region
  $region14: #{city_adaptation_forward.1} parent=0 // pred_check
    _
  $region15: #{city_adaptation_forward.1} parent=0 // pred_check_branch
    %17 = sbr.rel (0) target = $region17
  $region16: #{city_adaptation_forward.1} parent=0 // pred_region
    _
  $region17: #{city_adaptation_forward.1} parent=0 // pred_fallthru
    _
  // Predicated region
  $region18: #{city_adaptation_forward.1} parent=0 // pred_check
    _
  $region19: #{city_adaptation_forward.1} parent=0 // pred_check_branch
    %19 = sbr.rel (0) target = $region21
  $region20: #{city_adaptation_forward.1} parent=0 // pred_region
    _
  $region21: #{city_adaptation_forward.1} parent=0 // pred_fallthru
    _
  %v20 = vld [vmem:[%s2] sm:$0x1]
  %v21 = vld [vmem:[%s2 + $0x1] sm:$0x1]
  %v22 = vld [vmem:[%s2 + $0x2] sm:$0x1]
  %v23 = vld [vmem:[%s2 + $0x3] sm:$0x1]
  %v24 = vld [vmem:[%s0] sm:$0xf]
  %v25 = vld [vmem:[%s0 + $0x4] sm:$0xf]
  %v26 = vld [vmem:[%s1] sm:$0xf]
  %v27 = vld [vmem:[%s1 + $0x4] sm:$0xf]
  %v28 = vld [vmem:[%s1 + $0x8] sm:$0xf]
  %v29 = vld [vmem:[%s1 + $0xc] sm:$0xf]
  %v30 = vld [vmem:[%s1 + $0x10] sm:$0xf]
  %v31 = vld [vmem:[%s1 + $0x14] sm:$0xf]
  %v32 = vld [vmem:[%s1 + $0x18] sm:$0xf]
  %v33 = vld [vmem:[%s1 + $0x1c] sm:$0xf]
  %v34 = vld [vmem:[%s1 + $0x20] sm:$0xf]
  %v35 = vld [vmem:[%s1 + $0x24] sm:$0xf]
  %v36 = vld [vmem:[%s1 + $0x28] sm:$0xf]
  %v37 = vld [vmem:[%s1 + $0x2c] sm:$0xf]
  %v38 = vld [vmem:[%s1 + $0x30] sm:$0xf]
  %v39 = vld [vmem:[%s1 + $0x34] sm:$0xf]
  %v40 = vld [vmem:[%s1 + $0x38] sm:$0xf]
  %v41 = vld [vmem:[%s1 + $0x3c] sm:$0xf]
  %v42 = vperm.slane %v20, 0
  %v45 = vunpack.c.l.b16 %v24
  %v46 = vunpack.c.l.b16 %v25
  %v47 = vpack.c.b16 %v46, %v45
  %v65 = vunpack.c.l.b16 %v26
  %v66 = vunpack.c.l.b16 %v27
  %v67 = vunpack.c.l.b16 %v28
  %v68 = vunpack.c.l.b16 %v29
  %v69 = vunpack.c.l.b16 %v30
  %v70 = vunpack.c.l.b16 %v31
  %v71 = vunpack.c.l.b16 %v32
  %v72 = vunpack.c.l.b16 %v33
  %v73 = vunpack.c.l.b16 %v34
  %v74 = vunpack.c.l.b16 %v35
  %v75 = vunpack.c.l.b16 %v36
  %v76 = vunpack.c.l.b16 %v37
  %v77 = vunpack.c.l.b16 %v38
  %v78 = vunpack.c.l.b16 %v39
  %v79 = vunpack.c.l.b16 %v40
  %v80 = vunpack.c.l.b16 %v41
  %v81 = vpack.c.b16 %v66, %v65
  %v82 = vpack.c.b16 %v68, %v67
  %v83 = vpack.c.b16 %v70, %v69
  %v84 = vpack.c.b16 %v72, %v71
  %v85 = vpack.c.b16 %v74, %v73
  %v86 = vpack.c.b16 %v76, %v75
  %v87 = vpack.c.b16 %v78, %v77
  %v88 = vpack.c.b16 %v80, %v79
  %97 = vmatpush.bf16.msra.mxu0 %v88
  %98 = vmatpush.bf16.msra.mxu0 %v87
  %99 = vmatpush.bf16.msra.mxu0 %v86
  %100 = vmatpush.bf16.msra.mxu0 %v85
  %101 = vmatpush.bf16.msra.mxu0 %v84
  %102 = vmatpush.bf16.msra.mxu0 %v83
  %103 = vmatpush.bf16.msra.mxu0 %v82
  %104 = vmatpush.bf16.msra.mxu0 %v81
  %105 = vmatmul.bf16.gmra.mxu0 %v47
  %v106 = vpop.f32.mrf.mxu0
  %v107 = vadd.f32 %v42, %v106
  %v108 = vpop.f32.mrf.mxu0
  %v109 = vadd.f32 %v42, %v108
  %110 = vdwg.mxu0
  %111 = vadd.xlane.f32.xlu0 %v107
  %v112 = vpop.xlane.xlu0 %111
  %113 = vadd.xlane.f32.xlu0 %v109
  %v114 = vpop.xlane.xlu0 %113
  %v115 = vmul.f32 %v112, 0.03125
  %v116 = vmul.f32 %v114, 0.03125
  %v117 = vsub.f32 %v107, %v115
  %v118 = vsub.f32 %v109, %v116
  %v119 = vmul.f32 %v117, %v117
  %v120 = vmul.f32 %v118, %v118
  %121 = vadd.xlane.f32.xlu0 %v119
  %v122 = vpop.xlane.xlu0 %121
  %123 = vadd.xlane.f32.xlu0 %v120
  %v124 = vpop.xlane.xlu0 %123
  %v125 = vmul.f32 %v115, 96.0
  %v126 = vmul.f32 %v116, 96.0
  %v127 = vmul.f32 %v125, %v115
  %v128 = vmul.f32 %v126, %v116
  %v129 = vsub.f32 %v122, %v127
  %v130 = vsub.f32 %v124, %v128
  %v131 = vmul.f32 %v129, 0.03125
  %v132 = vmul.f32 %v130, 0.03125
  %v133 = vadd.f32 %v131, 1e-05
  %v134 = vadd.f32 %v132, 1e-05
  %v135 = vrsqrt.pop %v133
  %v136 = vmul.f32 %v135, %v133
  %v137 = vmul.f32 %v136, %v135
  %v138 = vmul.f32 0.5, %v137
  %v139 = vsub.f32 1.5, %v138
  %v140 = vmul.f32 %v135, %v139
  %vm141 = vweird.f32 %v133
  %vm142 = vweird.f32 %v135
  %vm143 = vmor %vm141, %vm142
  %v144 = vsel %vm143, %v135, %v140
  %v145 = vrsqrt.pop %v134
  %v146 = vmul.f32 %v145, %v134
  %v147 = vmul.f32 %v146, %v145
  %v148 = vmul.f32 0.5, %v147
  %v149 = vsub.f32 1.5, %v148
  %v150 = vmul.f32 %v145, %v149
  %vm151 = vweird.f32 %v134
  %vm152 = vweird.f32 %v145
  %vm153 = vmor %vm151, %vm152
  %v154 = vsel %vm153, %v145, %v150
  %v155 = vmul.f32 %v117, %v144
  %v156 = vmul.f32 %v118, %v154
  %v157 = vperm.slane %v21, 0
  %v158 = vmul.f32 %v155, %v157
  %v159 = vmul.f32 %v156, %v157
  %v160 = vperm.slane %v22, 0
  %v161 = vadd.f32 %v158, %v160
  %v162 = vadd.f32 %v159, %v160
  %v163 = vmax.f32 %v161, 0.0
  %v164 = vmax.f32 %v162, 0.0
  %v165 = vpack.c.bf16 %v164, %v163
  %v166 = vld [vmem:[%s3] sm:$0xff]
  %v167 = vld [vmem:[%s3 + $0x8] sm:$0xff]
  %v168 = vld [vmem:[%s3 + $0x10] sm:$0xff]
  %v169 = vld [vmem:[%s3 + $0x18] sm:$0xff]
  %v170 = vld [vmem:[%s3 + $0x20] sm:$0xff]
  %v171 = vld [vmem:[%s3 + $0x28] sm:$0xff]
  %v172 = vld [vmem:[%s3 + $0x30] sm:$0xff]
  %v173 = vld [vmem:[%s3 + $0x38] sm:$0xff]
  %v174 = vld [vmem:[%s3 + $0x40] sm:$0xff]
  %v175 = vld [vmem:[%s3 + $0x48] sm:$0xff]
  %v176 = vld [vmem:[%s3 + $0x50] sm:$0xff]
  %v177 = vld [vmem:[%s3 + $0x58] sm:$0xff]
  %v178 = vld [vmem:[%s3 + $0x60] sm:$0xff]
  %v179 = vld [vmem:[%s3 + $0x68] sm:$0xff]
  %v180 = vld [vmem:[%s3 + $0x70] sm:$0xff]
  %v181 = vld [vmem:[%s3 + $0x78] sm:$0xff]
  %v198 = vunpack.c.l.b16 %v166
  %v199 = vunpack.c.h.b16 %v166
  %v200 = vunpack.c.l.b16 %v167
  %v201 = vunpack.c.h.b16 %v167
  %v202 = vunpack.c.l.b16 %v168
  %v203 = vunpack.c.h.b16 %v168
  %v204 = vunpack.c.l.b16 %v169
  %v205 = vunpack.c.h.b16 %v169
  %v206 = vunpack.c.l.b16 %v170
  %v207 = vunpack.c.h.b16 %v170
  %v208 = vunpack.c.l.b16 %v171
  %v209 = vunpack.c.h.b16 %v171
  %v210 = vunpack.c.l.b16 %v172
  %v211 = vunpack.c.h.b16 %v172
  %v212 = vunpack.c.l.b16 %v173
  %v213 = vunpack.c.h.b16 %v173
  %v214 = vunpack.c.l.b16 %v174
  %v215 = vunpack.c.h.b16 %v174
  %v216 = vunpack.c.l.b16 %v175
  %v217 = vunpack.c.h.b16 %v175
  %v218 = vunpack.c.l.b16 %v176
  %v219 = vunpack.c.h.b16 %v176
  %v220 = vunpack.c.l.b16 %v177
  %v221 = vunpack.c.h.b16 %v177
  %v222 = vunpack.c.l.b16 %v178
  %v223 = vunpack.c.h.b16 %v178
  %v224 = vunpack.c.l.b16 %v179
  %v225 = vunpack.c.h.b16 %v179
  %v226 = vunpack.c.l.b16 %v180
  %v227 = vunpack.c.h.b16 %v180
  %v228 = vunpack.c.l.b16 %v181
  %v229 = vunpack.c.h.b16 %v181
  %v230 = vpack.c.b16 %v200, %v198
  %v231 = vpack.c.b16 %v201, %v199
  %v232 = vpack.c.b16 %v204, %v202
  %v233 = vpack.c.b16 %v205, %v203
  %v234 = vpack.c.b16 %v208, %v206
  %v235 = vpack.c.b16 %v209, %v207
  %v236 = vpack.c.b16 %v212, %v210
  %v237 = vpack.c.b16 %v213, %v211
  %v238 = vpack.c.b16 %v216, %v214
  %v239 = vpack.c.b16 %v217, %v215
  %v240 = vpack.c.b16 %v220, %v218
  %v241 = vpack.c.b16 %v221, %v219
  %v242 = vpack.c.b16 %v224, %v222
  %v243 = vpack.c.b16 %v225, %v223
  %v244 = vpack.c.b16 %v228, %v226
  %v245 = vpack.c.b16 %v229, %v227
  %262 = vmatpush.bf16.msra.mxu0 %v244
  %263 = vmatpush.bf16.msra.mxu0 %v242
  %264 = vmatpush.bf16.msra.mxu0 %v240
  %265 = vmatpush.bf16.msra.mxu0 %v238
  %266 = vmatpush.bf16.msra.mxu0 %v236
  %267 = vmatpush.bf16.msra.mxu0 %v234
  %268 = vmatpush.bf16.msra.mxu0 %v232
  %269 = vmatpush.bf16.msra.mxu0 %v230
  %270 = vmatmul.bf16.gmra.mxu0 %v165
  %v271 = vpop.f32.mrf.mxu0
  %v272 = vadd.f32 0.0, %v271
  %v273 = vpop.f32.mrf.mxu0
  %v274 = vadd.f32 0.0, %v273
  %275 = vdwg.mxu0
  %276 = vmatpush.bf16.msra.mxu0 %v245
  %277 = vmatpush.bf16.msra.mxu0 %v243
  %278 = vmatpush.bf16.msra.mxu0 %v241
  %279 = vmatpush.bf16.msra.mxu0 %v239
  %280 = vmatpush.bf16.msra.mxu0 %v237
  %281 = vmatpush.bf16.msra.mxu0 %v235
  %282 = vmatpush.bf16.msra.mxu0 %v233
  %283 = vmatpush.bf16.msra.mxu0 %v231
  %284 = vmatmul.bf16.gmra.mxu0 %v165
  %v285 = vpop.f32.mrf.mxu0
  %v286 = vadd.f32 0.0, %v285
  %v287 = vpop.f32.mrf.mxu0
  %v288 = vadd.f32 0.0, %v287
  %289 = vdwg.mxu0
  %v290 = vperm.slane %v23, 0
  %v291 = vadd.f32 %v272, %v290
  %v292 = vadd.f32 %v274, %v290
  %v293 = vxor.u32 %v291, 2147483648
  %v294 = vxor.u32 %v292, 2147483648
  %v295 = vmul.f32 %v293, 1.442695
  %v296 = vpow.pop %v295
  %v297 = vmul.f32 %v294, 1.442695
  %v298 = vpow.pop %v297
  %v299 = vadd.f32 %v296, 1.0
  %v300 = vadd.f32 %v298, 1.0
  %v301 = vrcp.pop %v299
  %v302 = vmul.f32 %v299, %v301
  %v303 = vsub.f32 1.0, %v302
  %v304 = vmul.f32 %v301, %v303
  %v305 = vadd.f32 %v301, %v304
  %vm306 = vweird.f32 %v299
  %vm307 = vweird.f32 %v301
  %vm308 = vmor %vm306, %vm307
  %v309 = vsel %vm308, %v301, %v305
  %v310 = vand.u32 2147483647, %v299
  %vm311 = vcmp.eq.f32.partialorder %v310, 8.507059e+37
  %v312 = vand.u32 %v299, 2147483648
  %v313 = vor.u32 1.1754944e-38, %v312
  %v314 = vsel %vm311, %v313, %v309
  %v315 = vmul.f32 1.0, %v314
  %v316 = vrcp.pop %v300
  %v317 = vmul.f32 %v300, %v316
  %v318 = vsub.f32 1.0, %v317
  %v319 = vmul.f32 %v316, %v318
  %v320 = vadd.f32 %v316, %v319
  %vm321 = vweird.f32 %v300
  %vm322 = vweird.f32 %v316
  %vm323 = vmor %vm321, %vm322
  %v324 = vsel %vm323, %v316, %v320
  %v325 = vand.u32 2147483647, %v300
  %vm326 = vcmp.eq.f32.partialorder %v325, 8.507059e+37
  %v327 = vand.u32 %v300, 2147483648
  %v328 = vor.u32 1.1754944e-38, %v327
  %v329 = vsel %vm326, %v328, %v324
  %v330 = vmul.f32 1.0, %v329
  %v331 = vpack.c.bf16 %v288, %v286
  %v332 = vld [vmem:[%s4] sm:$0xf]
  %v333 = vld [vmem:[%s4 + $0x4] sm:$0xf]
  %v334 = vld [vmem:[%s4 + $0x8] sm:$0xf]
  %v335 = vld [vmem:[%s4 + $0xc] sm:$0xf]
  %v336 = vld [vmem:[%s4 + $0x10] sm:$0xf]
  %v337 = vld [vmem:[%s4 + $0x14] sm:$0xf]
  %v338 = vld [vmem:[%s4 + $0x18] sm:$0xf]
  %v339 = vld [vmem:[%s4 + $0x1c] sm:$0xf]
  %v340 = vld [vmem:[%s4 + $0x20] sm:$0xf]
  %v341 = vld [vmem:[%s4 + $0x24] sm:$0xf]
  %v342 = vld [vmem:[%s4 + $0x28] sm:$0xf]
  %v343 = vld [vmem:[%s4 + $0x2c] sm:$0xf]
  %v344 = vld [vmem:[%s4 + $0x30] sm:$0xf]
  %v345 = vld [vmem:[%s4 + $0x34] sm:$0xf]
  %v346 = vld [vmem:[%s4 + $0x38] sm:$0xf]
  %v347 = vld [vmem:[%s4 + $0x3c] sm:$0xf]
  %v364 = vunpack.c.l.b16 %v332
  %v365 = vunpack.c.l.b16 %v333
  %v366 = vunpack.c.l.b16 %v334
  %v367 = vunpack.c.l.b16 %v335
  %v368 = vunpack.c.l.b16 %v336
  %v369 = vunpack.c.l.b16 %v337
  %v370 = vunpack.c.l.b16 %v338
  %v371 = vunpack.c.l.b16 %v339
  %v372 = vunpack.c.l.b16 %v340
  %v373 = vunpack.c.l.b16 %v341
  %v374 = vunpack.c.l.b16 %v342
  %v375 = vunpack.c.l.b16 %v343
  %v376 = vunpack.c.l.b16 %v344
  %v377 = vunpack.c.l.b16 %v345
  %v378 = vunpack.c.l.b16 %v346
  %v379 = vunpack.c.l.b16 %v347
  %v380 = vpack.c.b16 %v365, %v364
  %v381 = vpack.c.b16 %v367, %v366
  %v382 = vpack.c.b16 %v369, %v368
  %v383 = vpack.c.b16 %v371, %v370
  %v384 = vpack.c.b16 %v373, %v372
  %v385 = vpack.c.b16 %v375, %v374
  %v386 = vpack.c.b16 %v377, %v376
  %v387 = vpack.c.b16 %v379, %v378
  %396 = vmatpush.bf16.msra.mxu0 %v387
  %397 = vmatpush.bf16.msra.mxu0 %v386
  %398 = vmatpush.bf16.msra.mxu0 %v385
  %399 = vmatpush.bf16.msra.mxu0 %v384
  %400 = vmatpush.bf16.msra.mxu0 %v383
  %401 = vmatpush.bf16.msra.mxu0 %v382
  %402 = vmatpush.bf16.msra.mxu0 %v381
  %403 = vmatpush.bf16.msra.mxu0 %v380
  %404 = vmatmul.bf16.gmra.mxu0 %v331
  %v405 = vpop.f32.mrf.mxu0
  %v406 = vadd.f32 0.0, %v405
  %v407 = vpop.f32.mrf.mxu0
  %v408 = vadd.f32 0.0, %v407
  %409 = vdwg.mxu0
  %v410 = vsub.f32 1.0, %v315
  %v411 = vsub.f32 1.0, %v330
  %v412 = vmul.f32 %v410, %v406
  %v413 = vmul.f32 %v411, %v408
  %v414 = vadd.f32 %v163, %v412
  %v415 = vadd.f32 %v164, %v413
  %416 = vst [vmem:[%s5] sm:$0xff] %v414
  %417 = vst [vmem:[%s5 + $0x8] sm:$0xff] %v415
  // Predicated region
  $region22: #{city_adaptation_forward.1} parent=0 // pred_check
    _
  $region23: #{city_adaptation_forward.1} parent=0 // pred_check_branch
    %419 = sbr.rel (0) target = $region25
  $region24: #{city_adaptation_forward.1} parent=0 // pred_region
    _
  $region25: #{city_adaptation_forward.1} parent=0 // pred_fallthru
    _
  // Predicated region
  $region26: #{city_adaptation_forward.1} parent=0 // pred_check
    _
  $region27: #{city_adaptation_forward.1} parent=0 // pred_check_branch
    %421 = sbr.rel (0) target = $region29
  $region28: #{city_adaptation_forward.1} parent=0 // pred_region
    _
  $region29: #{city_adaptation_forward.1} parent=0 // pred_fallthru
    _

</llo_original>
